<compile_context>
chip_gen: v7x
topology: tpu7x:2x2x1
jax: 0.10.0
libtpu: 0.0.40
codegen_flags: <defaults>
</compile_context>

<pallas_src>
import functools

import jax
import jax.numpy as jnp
from jax.experimental import pallas as pl
from jax.experimental.pallas import tpu as pltpu


def _round_up(a, b):
    return ((a + b - 1) // b) * b


def _dropout_threshold_u32(p):
    return min(int(round(p * (1 << 32))), (1 << 32) - 1)


def _prenorm_linear_drop_kernel(x_ref, bits_ref, gamma_ref, beta_ref,
                                w_ref, b_ref, o_ref, *, dropout_rate, eps):
    # ---- LayerNorm over the last dim (single-pass stats in f32) ----
    x = x_ref[...].astype(jnp.float32)
    mean = jnp.mean(x, axis=-1, keepdims=True)
    mean_sq = jnp.mean(x * x, axis=-1, keepdims=True)
    var = mean_sq - mean * mean
    xn = (x - mean) * jax.lax.rsqrt(var + eps)
    y = xn * gamma_ref[...].astype(jnp.float32) + beta_ref[...].astype(jnp.float32)

    # ---- fn: Linear(D, D) on the MXU (operands in weight dtype, f32 acc) ----
    z = jnp.dot(y.astype(w_ref.dtype), w_ref[...],
                preferred_element_type=jnp.float32)
    z = z + b_ref[...].astype(jnp.float32)

    # ---- Dropout: integer-threshold keep mask, 1/(1-p) scaling ----
    if dropout_rate > 0.0:
        threshold = jnp.uint32(_dropout_threshold_u32(dropout_rate))
        keep = bits_ref[...] >= threshold
        scale = jnp.float32(1.0 / (1.0 - dropout_rate))
        z = jnp.where(keep, z * scale, jnp.float32(0.0))

    o_ref[...] = z.astype(o_ref.dtype)


def prenorm_drop_forward(inputs, params, *, dropout_rate, seed=0, eps=1e-5):
    """inputs: {'x': [B,S,D], 'y': [B,S,D]} -> {'x': ..., 'y': ...}."""
    x, y = inputs["x"], inputs["y"]
    B, S, D = x.shape
    rows = B * S

    gamma = params["gamma"].reshape(1, D)
    beta = params["beta"].reshape(1, D)
    w = params["w"]                      # [D, D], applied as  z = y @ w + b
    b = params["b"].reshape(1, D)

    # Fuse the two streams into one slab -> single pallas_call, shared weights.
    xy = jnp.concatenate([x.reshape(rows, D), y.reshape(rows, D)], axis=0)
    R = 2 * rows

    # ---- row-tile selection: VMEM-aware, (8,128)-friendly ----
    x_it = xy.dtype.itemsize
    out_it = xy.dtype.itemsize
    w_it = w.dtype.itemsize
    # double-buffered x + bits + out bytes per row
    act_row_bytes = 2 * D * (x_it + 4 + out_it)
    tm = min(512, max(8, (12 * 1024 * 1024) // max(act_row_bytes, 1)),
             _round_up(R, 8))
    tm = max(8, (tm // 8) * 8)
    R_pad = _round_up(R, tm)

    # Dropout random bits (uniform uint32), one per output element of the
    # unpadded slab; pad rows with zeros (padded rows are discarded anyway).
    bits = jax.random.bits(jax.random.PRNGKey(seed), (R, D), dtype=jnp.uint32)
    if R_pad != R:
        xy = jnp.pad(xy, ((0, R_pad - R), (0, 0)))
        bits = jnp.pad(bits, ((0, R_pad - R), (0, 0)))

    grid = (R_pad // tm,)
    row_spec = pl.BlockSpec((tm, D), lambda i: (i, 0))
    vec_spec = pl.BlockSpec((1, D), lambda i: (0, 0))     # VMEM-resident
    mat_spec = pl.BlockSpec((D, D), lambda i: (0, 0))     # VMEM-resident

    flops = 2 * R_pad * D * D
    bytes_accessed = (R_pad * D * (x_it + 4 + out_it)
                      + D * D * w_it + 3 * D * gamma.dtype.itemsize)
    vmem_needed = (2 * tm * D * (x_it + 4 + out_it)   # double-buffered tiles
                   + D * D * w_it + 4 * D * 4         # resident params
                   + (2 << 20))                       # headroom
    vmem_limit = int(min(max(vmem_needed, 16 * 1024 * 1024),
                         64 * 1024 * 1024))           # v7x-safe ceiling

    kernel = functools.partial(_prenorm_linear_drop_kernel,
                               dropout_rate=float(dropout_rate),
                               eps=float(eps))

    out2d = pl.pallas_call(
        kernel,
        out_shape=jax.ShapeDtypeStruct((R_pad, D), xy.dtype),
        grid=grid,
        in_specs=[row_spec, row_spec, vec_spec, vec_spec, mat_spec, vec_spec],
        out_specs=row_spec,
        compiler_params=pltpu.CompilerParams(
            dimension_semantics=("parallel",),
            vmem_limit_bytes=vmem_limit),
        cost_estimate=pl.CostEstimate(flops=flops, transcendentals=0,
                                      bytes_accessed=bytes_accessed),
    )(xy, bits, gamma, beta, w, b)

    return {
        "x": out2d[:rows].reshape(B, S, D),
        "y": out2d[rows:2 * rows].reshape(B, S, D),
    }


if __name__ == "__main__":
    B, S, D = 2, 8, 32
    dropout_rate = 0.1
    seed = 0

    key = jax.random.PRNGKey(0)
    kx, ky, kw, kb = jax.random.split(key, 4)

    inputs = {
        "x": jax.random.normal(kx, (B, S, D), dtype=jnp.float32),
        "y": jax.random.normal(ky, (B, S, D), dtype=jnp.float32),
    }
    params = {
        "gamma": jnp.ones((D,), dtype=jnp.float32),
        "beta": jnp.zeros((D,), dtype=jnp.float32),
        "w": jax.random.normal(kw, (D, D), dtype=jnp.float32) * (1.0 / D ** 0.5),
        "b": jax.random.normal(kb, (D,), dtype=jnp.float32) * 0.01,
    }

    out = prenorm_drop_forward(inputs, params, dropout_rate=dropout_rate,
                               seed=seed)
    jax.block_until_ready(out["x"])
    jax.block_until_ready(out["y"])
    assert out["x"].shape == (B, S, D) and out["y"].shape == (B, S, D)

    # ---- pure-JAX reference (same random bits) for a sanity check ----
    g = params["gamma"].reshape(1, D)
    be = params["beta"].reshape(1, D)
    w_ = params["w"]
    b_ = params["b"].reshape(1, D)
    bits_ref = jax.random.bits(jax.random.PRNGKey(seed), (2 * B * S, D),
                               dtype=jnp.uint32)
    thr = jnp.uint32(_dropout_threshold_u32(dropout_rate))
    scale = jnp.float32(1.0 / (1.0 - dropout_rate))

    def _ref_stream(t, bits_slab):
        t2 = t.reshape(-1, D).astype(jnp.float32)
        m = jnp.mean(t2, axis=-1, keepdims=True)
        v = jnp.mean(t2 * t2, axis=-1, keepdims=True) - m * m
        xn = (t2 - m) * jax.lax.rsqrt(v + 1e-5)
        yv = xn * g + be
        z = yv @ w_ + b_
        z = jnp.where(bits_slab >= thr, z * scale, jnp.float32(0.0))
        return z.reshape(B, S, D)

    ref = {
        "x": _ref_stream(inputs["x"], bits_ref[:B * S]),
        "y": _ref_stream(inputs["y"], bits_ref[B * S:]),
    }
    for k in ("x", "y"):
        assert jnp.allclose(out[k], ref[k], rtol=1e-3, atol=1e-3), k

    print("KERNEL_OK")
</pallas_src>

<mosaic_0001>
module attributes {stable_mosaic.version = 11 : i64} {
  func.func @_prenorm_linear_drop_kernel(%arg0: i32, %arg1: memref<32x32xf32, #tpu.memory_space<vmem>>, %arg2: memref<32x32xi32, #tpu.memory_space<vmem>>, %arg3: memref<1x32xf32, #tpu.memory_space<vmem>>, %arg4: memref<1x32xf32, #tpu.memory_space<vmem>>, %arg5: memref<32x32xf32, #tpu.memory_space<vmem>>, %arg6: memref<1x32xf32, #tpu.memory_space<vmem>>, %arg7: memref<32x32xf32, #tpu.memory_space<vmem>>) attributes {dimension_semantics = [#tpu.dimension_semantics<parallel>], iteration_bounds = array<i64: 1>, scalar_prefetch = 0 : i64, scratch_operands = 0 : i64, tpu.core_type = #tpu.core_type<tc>, window_params = [{transform_indices = @transform_0, window_bounds = array<i64: 32, 32>}, {transform_indices = @transform_1, window_bounds = array<i64: 32, 32>}, {pipeline_mode = #tpu.pipeline_mode<synchronous>, transform_indices = @transform_2, window_bounds = array<i64: 1, 32>}, {pipeline_mode = #tpu.pipeline_mode<synchronous>, transform_indices = @transform_3, window_bounds = array<i64: 1, 32>}, {pipeline_mode = #tpu.pipeline_mode<synchronous>, transform_indices = @transform_4, window_bounds = array<i64: 32, 32>}, {pipeline_mode = #tpu.pipeline_mode<synchronous>, transform_indices = @transform_5, window_bounds = array<i64: 1, 32>}, {transform_indices = @transform_6, window_bounds = array<i64: 32, 32>}]} {
    %c0 = arith.constant 0 : index
    %c0_0 = arith.constant 0 : index
    %0 = vector.load %arg1[%c0, %c0_0] : memref<32x32xf32, #tpu.memory_space<vmem>>, vector<32x32xf32>
    %cst = arith.constant dense<0.000000e+00> : vector<32xf32>
    %1 = vector.multi_reduction <add>, %0, %cst [1] : vector<32x32xf32> to vector<32xf32>
    %2 = vector.shape_cast %1 : vector<32xf32> to vector<32x1xf32>
    %cst_1 = arith.constant 3.200000e+01 : f32
    %3 = vector.broadcast %cst_1 : f32 to vector<32x1xf32>
    %4 = arith.divf %2, %3 : vector<32x1xf32>
    %5 = arith.mulf %0, %0 : vector<32x32xf32>
    %cst_2 = arith.constant dense<0.000000e+00> : vector<32xf32>
    %6 = vector.multi_reduction <add>, %5, %cst_2 [1] : vector<32x32xf32> to vector<32xf32>
    %7 = vector.shape_cast %6 : vector<32xf32> to vector<32x1xf32>
    %cst_3 = arith.constant 3.200000e+01 : f32
    %8 = vector.broadcast %cst_3 : f32 to vector<32x1xf32>
    %9 = arith.divf %7, %8 : vector<32x1xf32>
    %10 = arith.mulf %4, %4 : vector<32x1xf32>
    %11 = arith.subf %9, %10 : vector<32x1xf32>
    %12 = vector.broadcast %4 : vector<32x1xf32> to vector<32x32xf32>
    %13 = arith.subf %0, %12 : vector<32x32xf32>
    %cst_4 = arith.constant 9.99999974E-6 : f32
    %14 = vector.broadcast %cst_4 : f32 to vector<32x1xf32>
    %15 = arith.addf %11, %14 : vector<32x1xf32>
    %16 = math.rsqrt %15 : vector<32x1xf32>
    %17 = vector.broadcast %16 : vector<32x1xf32> to vector<32x32xf32>
    %18 = arith.mulf %13, %17 : vector<32x32xf32>
    %c0_5 = arith.constant 0 : index
    %c0_6 = arith.constant 0 : index
    %19 = vector.load %arg3[%c0_5, %c0_6] : memref<1x32xf32, #tpu.memory_space<vmem>>, vector<1x32xf32>
    %20 = vector.broadcast %19 : vector<1x32xf32> to vector<32x32xf32>
    %21 = arith.mulf %18, %20 : vector<32x32xf32>
    %c0_7 = arith.constant 0 : index
    %c0_8 = arith.constant 0 : index
    %22 = vector.load %arg4[%c0_7, %c0_8] : memref<1x32xf32, #tpu.memory_space<vmem>>, vector<1x32xf32>
    %23 = vector.broadcast %22 : vector<1x32xf32> to vector<32x32xf32>
    %24 = arith.addf %21, %23 : vector<32x32xf32>
    %c0_9 = arith.constant 0 : index
    %c0_10 = arith.constant 0 : index
    %25 = vector.load %arg5[%c0_9, %c0_10] : memref<32x32xf32, #tpu.memory_space<vmem>>, vector<32x32xf32>
    %cst_11 = arith.constant dense<0.000000e+00> : vector<32x32xf32>
    %26 = tpu.matmul %24, %25, %cst_11 {dimension_numbers = #tpu.dot_dimension_numbers<[1], [0], [0], [1], [0, 0, 1, 1], [], []>} : vector<32x32xf32>, vector<32x32xf32>, vector<32x32xf32> -> vector<32x32xf32>
    %c0_12 = arith.constant 0 : index
    %c0_13 = arith.constant 0 : index
    %27 = vector.load %arg6[%c0_12, %c0_13] : memref<1x32xf32, #tpu.memory_space<vmem>>, vector<1x32xf32>
    %28 = vector.broadcast %27 : vector<1x32xf32> to vector<32x32xf32>
    %29 = arith.addf %26, %28 : vector<32x32xf32>
    %c0_14 = arith.constant 0 : index
    %c0_15 = arith.constant 0 : index
    %30 = vector.load %arg2[%c0_14, %c0_15] : memref<32x32xi32, #tpu.memory_space<vmem>>, vector<32x32xi32>
    %c429496730_i32 = arith.constant 429496730 : i32
    %31 = vector.broadcast %c429496730_i32 : i32 to vector<32x32xi32>
    %32 = arith.cmpi uge, %30, %31 : vector<32x32xi32>
    %cst_16 = arith.constant 1.11111116 : f32
    %33 = vector.broadcast %cst_16 : f32 to vector<32x32xf32>
    %34 = arith.mulf %29, %33 : vector<32x32xf32>
    %cst_17 = arith.constant 0.000000e+00 : f32
    %35 = vector.broadcast %cst_17 : f32 to vector<32x32xf32>
    %36 = arith.select %32, %34, %35 : vector<32x32xi1>, vector<32x32xf32>
    %c0_18 = arith.constant 0 : index
    %c0_19 = arith.constant 0 : index
    %37 = vector.load %arg7[%c0_18, %c0_19] : memref<32x32xf32, #tpu.memory_space<vmem>>, vector<32x32xf32>
    tpu.vector_store %arg7[%c0_18, %c0_19], %36 {strides = array<i32>} : memref<32x32xf32, #tpu.memory_space<vmem>>, vector<32x32xf32>,
    return
  }
  func.func @transform_0(%arg0: i32) -> (i32, i32) {
    %c0_i32 = arith.constant 0 : i32
    %c0_i32_0 = arith.constant 0 : i32
    return %arg0, %c0_i32 : i32, i32
  }
  func.func @transform_1(%arg0: i32) -> (i32, i32) {
    %c0_i32 = arith.constant 0 : i32
    %c0_i32_0 = arith.constant 0 : i32
    return %arg0, %c0_i32 : i32, i32
  }
  func.func @transform_2(%arg0: i32) -> (i32, i32) {
    %c0_i32 = arith.constant 0 : i32
    %c0_i32_0 = arith.constant 0 : i32
    %c0_i32_1 = arith.constant 0 : i32
    return %c0_i32, %c0_i32_0 : i32, i32
  }
  func.func @transform_3(%arg0: i32) -> (i32, i32) {
    %c0_i32 = arith.constant 0 : i32
    %c0_i32_0 = arith.constant 0 : i32
    %c0_i32_1 = arith.constant 0 : i32
    return %c0_i32, %c0_i32_0 : i32, i32
  }
  func.func @transform_4(%arg0: i32) -> (i32, i32) {
    %c0_i32 = arith.constant 0 : i32
    %c0_i32_0 = arith.constant 0 : i32
    %c0_i32_1 = arith.constant 0 : i32
    return %c0_i32, %c0_i32_0 : i32, i32
  }
  func.func @transform_5(%arg0: i32) -> (i32, i32) {
    %c0_i32 = arith.constant 0 : i32
    %c0_i32_0 = arith.constant 0 : i32
    %c0_i32_1 = arith.constant 0 : i32
    return %c0_i32, %c0_i32_0 : i32, i32
  }
  func.func @transform_6(%arg0: i32) -> (i32, i32) {
    %c0_i32 = arith.constant 0 : i32
    %c0_i32_0 = arith.constant 0 : i32
    return %arg0, %c0_i32 : i32, i32
  }
}

</mosaic_0001>

<llo_original>
// kernel: tpu_custom_call.1
$region0: #{tpu_custom_call.1}
  #allocation0 [shape = 'u32[]', space=smem, size = 0x4, offset = 0x4, fixed_abs, tag = 'smem constant byte address 0x4 - core index']
  #allocation1 [shape = 'u32[144,128]{1,0:T(1,128)}', space=vmem, size = 0x12000, scoped, tag = 'internal scratch']
  %s0 = inlined_call_operand.hbm [shape: f32[32,32], index: 0, kind: input, shape index: {}]
  %s1 = inlined_call_operand.hbm [shape: u32[32,32], index: 1, kind: input, shape index: {}]
  %s2 = inlined_call_operand.vmem [shape: f32[1,32], index: 2, kind: input, shape index: {}]
  %s3 = inlined_call_operand.vmem [shape: f32[1,32], index: 3, kind: input, shape index: {}]
  %s4 = inlined_call_operand.hbm [shape: f32[32,32], index: 4, kind: input, shape index: {}]
  %s5 = inlined_call_operand.vmem [shape: f32[1,32], index: 5, kind: input, shape index: {}]
  %s6 = inlined_call_operand.hbm [shape: f32[32,32], index: 6, kind: output, shape index: {}]
  %s7 = sld [smem:[#allocation0]]
  $region46: #{tpu_custom_call.1} parent=0
    _
  %s9 = ssub.s32 1, %s7
  %s10 = scalar_select 0, %s9, %s7
  $region1: #{tpu_custom_call.1} parent=0
    #allocation2 [shape = 'u8[16384]{0}', space=vmem, size = 0x4000, scoped, tag = 'input window, operand 0, single buffered']
    #allocation3 [shape = 's32[1]{0}', space=sflag, size = 0x4, scoped, tag = 'scoped memory for tpu_custom_call.1']
    #allocation4 [shape = 's32[1]{0}', space=sflag, size = 0x4, scoped, tag = 'scoped memory for tpu_custom_call.1']
    #allocation5 [shape = 'u8[16384]{0}', space=vmem, size = 0x4000, scoped, tag = 'input window, operand 1, single buffered']
    #allocation6 [shape = 's32[1]{0}', space=sflag, size = 0x4, scoped, tag = 'scoped memory for tpu_custom_call.1']
    #allocation7 [shape = 'u8[16384]{0}', space=vmem, size = 0x4000, scoped, tag = 'input window, operand 4, single buffered']
    #allocation8 [shape = 'u8[16384]{0}', space=vmem, size = 0x4000, scoped, tag = 'output window, operand 0, single buffered']
    %11 = vsyncpa [#allocation3], 0
    %12 = vsyncpa [#allocation6], 0
    %13 = vsyncpa [#allocation4], 0
    // Predicated region
    $region2: #{tpu_custom_call.1} parent=1 // pred_check
      _
    $region3: #{tpu_custom_call.1} parent=1 // pred_check_branch
      %15 = sbr.rel (0) target = $region5
    $region4: #{tpu_custom_call.1} parent=1 // pred_region
      %s17 = ssub.s32 512, 512
      %18 = vsyncadd [#allocation3], %s17
      %s19 = sshll.u32 [#allocation2], 4
      %s20 = int_to_ptr.vmem [resolvable:$true] %s19
      %25 = dma.hbm_to_vmem [thread:$0]  %s0, 512, %s20, [#allocation3], 128, 128, 8
    $region5: #{tpu_custom_call.1} parent=1 // pred_fallthru
      _
    // Predicated region
    $region6: #{tpu_custom_call.1} parent=1 // pred_check
      _
    $region7: #{tpu_custom_call.1} parent=1 // pred_check_branch
      %27 = sbr.rel (0) target = $region9
    $region8: #{tpu_custom_call.1} parent=1 // pred_region
      %s29 = ssub.s32 512, 512
      %30 = vsyncadd [#allocation6], %s29
      %s31 = sshll.u32 [#allocation5], 4
      %s32 = int_to_ptr.vmem [resolvable:$true] %s31
      %37 = dma.hbm_to_vmem [thread:$0]  %s1, 512, %s32, [#allocation6], 128, 128, 8
    $region9: #{tpu_custom_call.1} parent=1 // pred_fallthru
      _
    // Predicated region
    $region10: #{tpu_custom_call.1} parent=1 // pred_check
      _
    $region11: #{tpu_custom_call.1} parent=1 // pred_check_branch
      %39 = sbr.rel (0) target = $region13
    $region12: #{tpu_custom_call.1} parent=1 // pred_region
      _
    $region13: #{tpu_custom_call.1} parent=1 // pred_fallthru
      _
    // Predicated region
    $region14: #{tpu_custom_call.1} parent=1 // pred_check
      _
    $region15: #{tpu_custom_call.1} parent=1 // pred_check_branch
      %41 = sbr.rel (0) target = $region17
    $region16: #{tpu_custom_call.1} parent=1 // pred_region
      _
    $region17: #{tpu_custom_call.1} parent=1 // pred_fallthru
      _
    // Predicated region
    $region18: #{tpu_custom_call.1} parent=1 // pred_check
      _
    $region19: #{tpu_custom_call.1} parent=1 // pred_check_branch
      %43 = sbr.rel (0) target = $region21
    $region20: #{tpu_custom_call.1} parent=1 // pred_region
      %s45 = ssub.s32 512, 512
      %46 = vsyncadd [#allocation6], %s45
      %s47 = sshll.u32 [#allocation7], 4
      %s48 = int_to_ptr.vmem [resolvable:$true] %s47
      %53 = dma.hbm_to_vmem [thread:$0]  %s4, 512, %s48, [#allocation6], 128, 128, 8
    $region21: #{tpu_custom_call.1} parent=1 // pred_fallthru
      _
    // Predicated region
    $region22: #{tpu_custom_call.1} parent=1 // pred_check
      _
    $region23: #{tpu_custom_call.1} parent=1 // pred_check_branch
      %55 = sbr.rel (0) target = $region25
    $region24: #{tpu_custom_call.1} parent=1 // pred_region
      _
    $region25: #{tpu_custom_call.1} parent=1 // pred_fallthru
      _
    // Predicated region
    $region26: #{tpu_custom_call.1} parent=1 // pred_check
      _
    $region27: #{tpu_custom_call.1} parent=1 // pred_check_branch
      %57 = sbr.rel (0) target = $region29
    $region28: #{tpu_custom_call.1} parent=1 // pred_region
      %58 = dma.done [#allocation3], 512
    $region29: #{tpu_custom_call.1} parent=1 // pred_fallthru
      _
    // Predicated region
    $region30: #{tpu_custom_call.1} parent=1 // pred_check
      _
    $region31: #{tpu_custom_call.1} parent=1 // pred_check_branch
      %60 = sbr.rel (0) target = $region33
    $region32: #{tpu_custom_call.1} parent=1 // pred_region
      %61 = dma.done [#allocation6], 512
    $region33: #{tpu_custom_call.1} parent=1 // pred_fallthru
      _
    // Predicated region
    $region34: #{tpu_custom_call.1} parent=1 // pred_check
      _
    $region35: #{tpu_custom_call.1} parent=1 // pred_check_branch
      %63 = sbr.rel (0) target = $region37
    $region36: #{tpu_custom_call.1} parent=1 // pred_region
      %64 = dma.done [#allocation6], 512
    $region37: #{tpu_custom_call.1} parent=1 // pred_fallthru
      _
    %v65 = vld [vmem:[#allocation2] sm:$0xff]
    %v66 = vld [vmem:[#allocation2 + $0x8] sm:$0xff]
    %v67 = vld [vmem:[#allocation2 + $0x10] sm:$0xff]
    %v68 = vld [vmem:[#allocation2 + $0x18] sm:$0xff]
    %vm69 = vcmask 261120
    %v70 = vsel %vm69, %v65, 0.0
    %71 = vadd.xlane.f32.xlu0 %v70
    %v72 = vpop.xlane.xlu0 %71
    %v73 = vsel %vm69, %v66, 0.0
    %74 = vadd.xlane.f32.xlu0 %v73
    %v75 = vpop.xlane.xlu0 %74
    %v76 = vsel %vm69, %v67, 0.0
    %77 = vadd.xlane.f32.xlu0 %v76
    %v78 = vpop.xlane.xlu0 %77
    %v79 = vsel %vm69, %v68, 0.0
    %80 = vadd.xlane.f32.xlu0 %v79
    %v81 = vpop.xlane.xlu0 %80
    %v82 = vrcp.pop 32.0
    %v83 = vmul.f32 %v72, %v82
    %v84 = vmul.f32 %v75, %v82
    %v85 = vmul.f32 %v78, %v82
    %v86 = vmul.f32 %v81, %v82
    %v87 = vmul.f32 %v65, %v65
    %v88 = vmul.f32 %v66, %v66
    %v89 = vmul.f32 %v67, %v67
    %v90 = vmul.f32 %v68, %v68
    %v91 = vsel %vm69, %v87, 0.0
    %92 = vadd.xlane.f32.xlu0 %v91
    %v93 = vpop.xlane.xlu0 %92
    %v94 = vsel %vm69, %v88, 0.0
    %95 = vadd.xlane.f32.xlu0 %v94
    %v96 = vpop.xlane.xlu0 %95
    %v97 = vsel %vm69, %v89, 0.0
    %98 = vadd.xlane.f32.xlu0 %v97
    %v99 = vpop.xlane.xlu0 %98
    %v100 = vsel %vm69, %v90, 0.0
    %101 = vadd.xlane.f32.xlu0 %v100
    %v102 = vpop.xlane.xlu0 %101
    %v103 = vmul.f32 %v93, %v82
    %v104 = vmul.f32 %v96, %v82
    %v105 = vmul.f32 %v99, %v82
    %v106 = vmul.f32 %v102, %v82
    %v107 = vmul.f32 %v83, %v83
    %v108 = vmul.f32 %v84, %v84
    %v109 = vmul.f32 %v85, %v85
    %v110 = vmul.f32 %v86, %v86
    %v111 = vsub.f32 %v103, %v107
    %v112 = vsub.f32 %v104, %v108
    %v113 = vsub.f32 %v105, %v109
    %v114 = vsub.f32 %v106, %v110
    %v115 = vsub.f32 %v65, %v83
    %v116 = vsub.f32 %v66, %v84
    %v117 = vsub.f32 %v67, %v85
    %v118 = vsub.f32 %v68, %v86
    %v119 = vadd.f32 %v111, 1e-05
    %v120 = vadd.f32 %v112, 1e-05
    %v121 = vadd.f32 %v113, 1e-05
    %v122 = vadd.f32 %v114, 1e-05
    %v123 = vrsqrt.pop %v119
    %v124 = vrsqrt.pop %v120
    %v125 = vrsqrt.pop %v121
    %v126 = vrsqrt.pop %v122
    %v127 = vmul.f32 %v115, %v123
    %v128 = vmul.f32 %v116, %v124
    %v129 = vmul.f32 %v117, %v125
    %v130 = vmul.f32 %v118, %v126
    %v131 = vld [vmem:[%s2] sm:$0x1]
    %v133 = vlaneseq
    %v134 = vshrl.u32 %v133, 7
    %v135 = vsub.s32 0, %v134
    %v136 = vrot.slane %v131, %v135
    %v138 = vmul.f32 %v127, %v136
    %v139 = vmul.f32 %v128, %v136
    %v140 = vmul.f32 %v129, %v136
    %v141 = vmul.f32 %v130, %v136
    %v142 = vld [vmem:[%s3] sm:$0x1]
    %v144 = vlaneseq
    %v145 = vshrl.u32 %v144, 7
    %v146 = vsub.s32 0, %v145
    %v147 = vrot.slane %v142, %v146
    %v149 = vadd.f32 %v138, %v147
    %v150 = vadd.f32 %v139, %v147
    %v151 = vadd.f32 %v140, %v147
    %v152 = vadd.f32 %v141, %v147
    %v153 = vld [vmem:[#allocation7] sm:$0xff]
    %v154 = vld [vmem:[#allocation7 + $0x8] sm:$0xff]
    %v155 = vld [vmem:[#allocation7 + $0x10] sm:$0xff]
    %v156 = vld [vmem:[#allocation7 + $0x18] sm:$0xff]
    %v157 = vld [vmem:[%s5] sm:$0x1]
    %v159 = vlaneseq
    %v160 = vshrl.u32 %v159, 7
    %v161 = vsub.s32 0, %v160
    %v162 = vrot.slane %v157, %v161
    %v165 = vsel %vm69, %v149, 0
    %v168 = vsel %vm69, %v150, 0
    %v171 = vsel %vm69, %v151, 0
    %v174 = vsel %vm69, %v152, 0
    %176 = vmatprep.subr.mxu0 0.0
    %177 = vmatpush1.msra.mxu0 %v153
    %178 = vmatprep.subr.mxu0 0.0
    %179 = vmatpush1.msra.mxu0 %v154
    %180 = vmatprep.subr.mxu0 0.0
    %181 = vmatpush1.msra.mxu0 %v155
    %182 = vmatprep.subr.mxu0 0.0
    %183 = vmatpush1.msra.mxu0 %v156
    %184 = vmatprep.subr.mxu0 0.0
    %185 = vmatpush1.msra.mxu0 0.0
    %186 = vmatprep.subr.mxu0 0.0
    %187 = vmatpush1.msra.mxu0 0.0
    %188 = vmatprep.subr.mxu0 0.0
    %189 = vmatpush1.msra.mxu0 0.0
    %190 = vmatprep.subr.mxu0 0.0
    %191 = vmatpush1.msra.mxu0 0.0
    %192 = vmatprep.subr.mxu0 0.0
    %193 = vmatpush1.msra.mxu0 0.0
    %194 = vmatprep.subr.mxu0 0.0
    %195 = vmatpush1.msra.mxu0 0.0
    %196 = vmatprep.subr.mxu0 0.0
    %197 = vmatpush1.msra.mxu0 0.0
    %198 = vmatprep.subr.mxu0 0.0
    %199 = vmatpush1.msra.mxu0 0.0
    %200 = vmatprep.subr.mxu0 0.0
    %201 = vmatpush1.msra.mxu0 0.0
    %202 = vmatprep.subr.mxu0 0.0
    %203 = vmatpush1.msra.mxu0 0.0
    %204 = vmatprep.subr.mxu0 0.0
    %205 = vmatpush1.msra.mxu0 0.0
    %206 = vmatprep.subr.mxu0 0.0
    %207 = vmatpush1.msra.mxu0 0.0
    %208 = vmatprep.subr.mxu0 0.0
    %209 = vmatpush1.msra.mxu0 0.0
    %210 = vmatprep.subr.mxu0 0.0
    %211 = vmatpush1.msra.mxu0 0.0
    %212 = vmatprep.subr.mxu0 0.0
    %213 = vmatpush1.msra.mxu0 0.0
    %214 = vmatprep.subr.mxu0 0.0
    %215 = vmatpush1.msra.mxu0 0.0
    %216 = vmatprep.subr.mxu0 0.0
    %217 = vmatpush1.msra.mxu0 0.0
    %218 = vmatprep.subr.mxu0 0.0
    %219 = vmatpush1.msra.mxu0 0.0
    %220 = vmatprep.subr.mxu0 0.0
    %221 = vmatpush1.msra.mxu0 0.0
    %222 = vmatprep.subr.mxu0 0.0
    %223 = vmatpush1.msra.mxu0 0.0
    %224 = vmatprep.subr.mxu0 0.0
    %225 = vmatpush1.msra.mxu0 0.0
    %226 = vmatprep.subr.mxu0 0.0
    %227 = vmatpush1.msra.mxu0 0.0
    %228 = vmatprep.subr.mxu0 0.0
    %229 = vmatpush1.msra.mxu0 0.0
    %230 = vmatprep.subr.mxu0 0.0
    %231 = vmatpush1.msra.mxu0 0.0
    %232 = vmatprep.subr.mxu0 0.0
    %233 = vmatpush1.msra.mxu0 0.0
    %234 = vmatprep.subr.mxu0 0.0
    %235 = vmatpush1.msra.mxu0 0.0
    %236 = vmatprep.subr.mxu0 0.0
    %237 = vmatpush1.msra.mxu0 0.0
    %238 = vmatprep.subr.mxu0 0.0
    %239 = vmatpush1.msra.mxu0 0.0
    %240 = vmatprep.mubr.f32.mxu0 0.0
    %241 = vmatmul.mubr.f32.gmra.mrb[0].mxu0 %v165
    %v242 = vpop.f32.mrb[0].mxu0
    %v243 = vadd.f32 %v162, %v242
    %v244 = vpop.f32.mrb[0].mxu0
    %245 = vmatprep.mubr.f32.mxu0 0.0
    %246 = vmatmul.mubr.f32.gmra.mrb[0].mxu0 %v168
    %v247 = vpop.f32.mrb[0].mxu0
    %v248 = vadd.f32 %v162, %v247
    %v249 = vpop.f32.mrb[0].mxu0
    %250 = vmatprep.mubr.f32.mxu0 0.0
    %251 = vmatmul.mubr.f32.gmra.mrb[0].mxu0 %v171
    %v252 = vpop.f32.mrb[0].mxu0
    %v253 = vadd.f32 %v162, %v252
    %v254 = vpop.f32.mrb[0].mxu0
    %255 = vmatprep.mubr.f32.mxu0 0.0
    %256 = vmatmul.mubr.f32.gmra.mrb[0].mxu0 %v174
    %v257 = vpop.f32.mrb[0].mxu0
    %v258 = vadd.f32 %v162, %v257
    %v259 = vpop.f32.mrb[0].mxu0
    %260 = vdwg.mxu0
    %v261 = vld [vmem:[#allocation5] sm:$0xff]
    %v262 = vld [vmem:[#allocation5 + $0x8] sm:$0xff]
    %v263 = vld [vmem:[#allocation5 + $0x10] sm:$0xff]
    %v264 = vld [vmem:[#allocation5 + $0x18] sm:$0xff]
    %vm265 = vcmp.ge.u32.totalorder %v261, 429496730
    %vm266 = vcmp.ge.u32.totalorder %v262, 429496730
    %vm267 = vcmp.ge.u32.totalorder %v263, 429496730
    %vm268 = vcmp.ge.u32.totalorder %v264, 429496730
    %v269 = vmul.f32 %v243, 1.1111112
    %v270 = vmul.f32 %v248, 1.1111112
    %v271 = vmul.f32 %v253, 1.1111112
    %v272 = vmul.f32 %v258, 1.1111112
    %v273 = vsel %vm265, %v269, 0.0
    %v274 = vsel %vm266, %v270, 0.0
    %v275 = vsel %vm267, %v271, 0.0
    %v276 = vsel %vm268, %v272, 0.0
    %277 = vst.msk [vmem:[#allocation8] sm:$0xff] %vm69, %v273
    %278 = vst.msk [vmem:[#allocation8 + $0x8] sm:$0xff] %vm69, %v274
    %279 = vst.msk [vmem:[#allocation8 + $0x10] sm:$0xff] %vm69, %v275
    %280 = vst.msk [vmem:[#allocation8 + $0x18] sm:$0xff] %vm69, %v276
    // Predicated region
    $region38: #{tpu_custom_call.1} parent=1 // pred_check
      _
    $region39: #{tpu_custom_call.1} parent=1 // pred_check_branch
      %282 = sbr.rel (0) target = $region41
    $region40: #{tpu_custom_call.1} parent=1 // pred_region
      %s284 = ssub.s32 512, 512
      %285 = vsyncadd [#allocation4], %s284
      %s286 = sshll.u32 [#allocation8], 4
      %s287 = int_to_ptr.vmem [resolvable:$true] %s286
      %292 = dma.vmem_to_hbm [thread:$0]  %s287, 512, %s6, [#allocation4], 128, 128, 8
    $region41: #{tpu_custom_call.1} parent=1 // pred_fallthru
      _
    // Predicated region
    $region42: #{tpu_custom_call.1} parent=1 // pred_check
      _
    $region43: #{tpu_custom_call.1} parent=1 // pred_check_branch
      %294 = sbr.rel (0) target = $region45
    $region44: #{tpu_custom_call.1} parent=1 // pred_region
      %295 = dma.done [#allocation4], 512
    $region45: #{tpu_custom_call.1} parent=1 // pred_fallthru
      _
    %296 = vsyncpa [#allocation3], 1
    %297 = vsyncpa [#allocation6], 1
    %298 = vsyncpa [#allocation4], 1

</llo_original>
